<compile_context>
chip_gen: v5e
topology: v5e:2x2
jax: 0.10.0
libtpu: 0.0.40
codegen_flags: <defaults>
</compile_context>

<pallas_src>
import jax
import jax.numpy as jnp
from jax.experimental import pallas as pl
from jax.experimental.pallas import tpu as pltpu

_LANES = 128
_MIN_GRID_STEPS = 4                 # keep a few steps so pipelining/megacore engage
_VMEM_LIMIT_BYTES = 32 * 1024 * 1024


def _round_up(x, m):
    return ((x + m - 1) // m) * m


def _per_buffer_byte_budget():
    """Per-VMEM-buffer block budget, chosen per TPU generation.

    ~4 MiB amortizes the ~0.35 us per-grid-step overhead against v6e/v7x HBM
    bandwidth (4 double-buffered blocks = 16 MiB, inside the 32 MiB scoped
    default); cap at 2 MiB on v5e so buffers stay well under its 16 MiB
    scoped-VMEM default even with internal scratch.
    """
    try:
        kind = jax.devices()[0].device_kind.lower()
    except Exception:
        kind = ""
    if ("v5 lite" in kind) or ("v5e" in kind) or ("v5lite" in kind):
        return 2 * 1024 * 1024
    return 4 * 1024 * 1024


def _modified_tanh_kernel(a_ref, x_ref, o_ref):
    # `a` is a (1,1) f32 in SMEM: no retrace when the learnable parameter
    # changes, and the per-step scalar read is free in a DMA-bound kernel.
    a = jnp.clip(a_ref[0, 0], 0.1, 1.0)
    inv = 1.0 / (1.0 + a)
    # Compute in f32 regardless of storage dtype (v5e lacks bf16 VPU/EUP);
    # the kernel is HBM-bound so the casts are hidden under DMA.
    x = x_ref[...].astype(jnp.float32)
    o_ref[...] = ((jnp.tanh(x) + a * x) * inv).astype(o_ref.dtype)


def _elementwise_fallback(x, a_f32):
    """Plain-jnp path for tiny inputs / the <128-element ragged tail."""
    a = jnp.clip(a_f32, 0.1, 1.0)
    xf = x.astype(jnp.float32)
    return ((jnp.tanh(xf) + a * xf) / (1.0 + a)).astype(x.dtype)


@jax.jit
def modified_tanh(x, a):
    """y = (tanh(x) + a*x) / (1 + a), with a clamped to [0.1, 1.0]. Forward only."""
    # TODO(synk): no gradient path for the learnable `a` (forward pass only).
    orig_shape = x.shape
    orig_dtype = x.dtype
    n = x.size

    a_f32 = jnp.asarray(a, jnp.float32).reshape(-1)[0]

    flat = x.reshape(-1)
    n_main = (n // _LANES) * _LANES

    # Inputs smaller than one lane row: not worth a kernel launch.
    if n_main == 0:
        return _elementwise_fallback(flat, a_f32).reshape(orig_shape)

    rows = n_main // _LANES
    x2d = flat[:n_main].reshape(rows, _LANES)

    itemsize = jnp.dtype(orig_dtype).itemsize
    # Sublane packing: 8 rows/vreg for 32-bit, 16 for bf16, 32 for 8-bit types.
    sub = 8 * max(1, 4 // itemsize)

    # Dtype-aware byte budget per buffer, capped so the grid has >= ~4 steps.
    budget_rows = max(sub, (_per_buffer_byte_budget() // (_LANES * itemsize)) // sub * sub)
    tile_rows = min(budget_rows, _round_up(pl.cdiv(rows, _MIN_GRID_STEPS), sub))
    if rows < sub:
        tile_rows = rows  # block == full array dim is always a legal layout
    grid = (pl.cdiv(rows, tile_rows),)

    padded_elems = grid[0] * tile_rows * _LANES
    cost = pl.CostEstimate(
        flops=3 * padded_elems,        # mul + add + scale
        transcendentals=padded_elems,  # tanh
        bytes_accessed=2 * padded_elems * itemsize,
    )

    a_smem = a_f32.reshape(1, 1)

    out2d = pl.pallas_call(
        _modified_tanh_kernel,
        out_shape=jax.ShapeDtypeStruct((rows, _LANES), orig_dtype),
        grid_spec=pltpu.PrefetchScalarGridSpec(
            num_scalar_prefetch=0,
            grid=grid,
            in_specs=[
                pl.BlockSpec(memory_space=pltpu.MemorySpace.SMEM),
                pl.BlockSpec((tile_rows, _LANES), lambda i: (i, 0)),
            ],
            out_specs=pl.BlockSpec((tile_rows, _LANES), lambda i: (i, 0)),
        ),
        compiler_params=pltpu.CompilerParams(
            dimension_semantics=("parallel",),   # shard grid across v7x TensorCores
            vmem_limit_bytes=_VMEM_LIMIT_BYTES,
        ),
        cost_estimate=cost,
    )(a_smem, x2d)

    out = out2d.reshape(-1)
    if n_main != n:
        # Ragged tail (< 128 elems): tiny plain-jnp op, no full-array pad copy.
        tail = _elementwise_fallback(flat[n_main:], a_f32)
        out = jnp.concatenate([out, tail])
    return out.reshape(orig_shape)


def _reference(x, a):
    a = min(max(float(a), 0.1), 1.0)
    xf = x.astype(jnp.float32)
    return ((jnp.tanh(xf) + a * xf) / (1.0 + a)).astype(x.dtype)


if __name__ == "__main__":
    key = jax.random.PRNGKey(0)
    k1, k2, k3 = jax.random.split(key, 3)

    # Learnable parameter, passed as a runtime value (shape (1,), like nn.Parameter).
    a = jnp.ones((1,), jnp.float32) * 0.5

    # Small NCHW activation input.
    x = jax.random.normal(k1, (2, 4, 16, 16), dtype=jnp.float32) * 4.0
    out = jax.block_until_ready(modified_tanh(x, a))
    assert out.shape == x.shape and out.dtype == x.dtype
    assert jnp.allclose(out, _reference(x, 0.5), atol=1e-5, rtol=1e-5), "f32 mismatch"

    # Updated parameter value: same trace (runtime scalar, not static arg).
    a_new = jnp.ones((1,), jnp.float32) * 0.8
    out2 = jax.block_until_ready(modified_tanh(x, a_new))
    assert jnp.allclose(out2, _reference(x, 0.8), atol=1e-5, rtol=1e-5), "a=0.8 mismatch"

    # Ragged size (not a multiple of 128): aligned prefix via kernel + jnp tail.
    x_rag = jax.random.normal(k2, (3, 50), dtype=jnp.float32)
    out_rag = jax.block_until_ready(modified_tanh(x_rag, a))
    assert jnp.allclose(out_rag, _reference(x_rag, 0.5), atol=1e-5, rtol=1e-5), "ragged mismatch"

    # bf16 storage (f32 compute inside the kernel).
    x_bf = jax.random.normal(k3, (2, 4, 16, 16), dtype=jnp.bfloat16)
    out_bf = jax.block_until_ready(modified_tanh(x_bf, a))
    ref_bf = _reference(x_bf, 0.5)
    assert out_bf.dtype == jnp.bfloat16
    assert jnp.allclose(out_bf.astype(jnp.float32), ref_bf.astype(jnp.float32),
                        atol=2e-2, rtol=2e-2), "bf16 mismatch"

    print("KERNEL_OK")
</pallas_src>

<mosaic_0001>
module attributes {stable_mosaic.version = 11 : i64} {
  func.func @_modified_tanh_kernel(%arg0: i32, %arg1: memref<1x1xf32, #tpu.memory_space<smem>>, %arg2: memref<8x128xf32, #tpu.memory_space<vmem>>, %arg3: memref<8x128xf32, #tpu.memory_space<vmem>>) attributes {dimension_semantics = [#tpu.dimension_semantics<parallel>], iteration_bounds = array<i64: 2>, scalar_prefetch = 0 : i64, scratch_operands = 0 : i64, tpu.core_type = #tpu.core_type<tc>, window_params = [{transform_indices = @transform_0, window_bounds = array<i64: 1, 1>}, {transform_indices = @transform_1, window_bounds = array<i64: 8, 128>}, {transform_indices = @transform_2, window_bounds = array<i64: 8, 128>}]} {
    %c0 = arith.constant 0 : index
    %c0_0 = arith.constant 0 : index
    %0 = memref.load %arg1[%c0, %c0_0] : memref<1x1xf32, #tpu.memory_space<smem>>
    %cst = arith.constant 1.000000e-01 : f32
    %cst_1 = arith.constant 1.000000e+00 : f32
    %1 = arith.maximumf %cst, %0 : f32
    %2 = arith.minimumf %cst_1, %1 : f32
    %cst_2 = arith.constant 1.000000e+00 : f32
    %3 = arith.addf %cst_2, %2 : f32
    %cst_3 = arith.constant 1.000000e+00 : f32
    %4 = arith.divf %cst_3, %3 : f32
    %c0_4 = arith.constant 0 : index
    %c0_5 = arith.constant 0 : index
    %5 = vector.load %arg2[%c0_4, %c0_5] : memref<8x128xf32, #tpu.memory_space<vmem>>, vector<8x128xf32>
    %6 = math.tanh %5 : vector<8x128xf32>
    %7 = vector.broadcast %2 : f32 to vector<8x128xf32>
    %8 = arith.mulf %7, %5 : vector<8x128xf32>
    %9 = arith.addf %6, %8 : vector<8x128xf32>
    %10 = vector.broadcast %4 : f32 to vector<8x128xf32>
    %11 = arith.mulf %9, %10 : vector<8x128xf32>
    %c0_6 = arith.constant 0 : index
    %c0_7 = arith.constant 0 : index
    %12 = vector.load %arg3[%c0_6, %c0_7] : memref<8x128xf32, #tpu.memory_space<vmem>>, vector<8x128xf32>
    tpu.vector_store %arg3[%c0_6, %c0_7], %11 {strides = array<i32>} : memref<8x128xf32, #tpu.memory_space<vmem>>, vector<8x128xf32>,
    return
  }
  func.func @transform_0(%arg0: i32) -> (i32, i32) {
    %c0_i32 = arith.constant 0 : i32
    %c0_i32_0 = arith.constant 0 : i32
    %c0_i32_1 = arith.constant 0 : i32
    return %c0_i32, %c0_i32_0 : i32, i32
  }
  func.func @transform_1(%arg0: i32) -> (i32, i32) {
    %c0_i32 = arith.constant 0 : i32
    %c0_i32_0 = arith.constant 0 : i32
    return %arg0, %c0_i32 : i32, i32
  }
  func.func @transform_2(%arg0: i32) -> (i32, i32) {
    %c0_i32 = arith.constant 0 : i32
    %c0_i32_0 = arith.constant 0 : i32
    return %arg0, %c0_i32 : i32, i32
  }
}

</mosaic_0001>

<llo_original>
// kernel: modified_tanh.1
$region0: #{modified_tanh.1}
  #allocation0 [shape = 'u32[]', space=smem, size = 0x4, offset = 0x4, fixed_abs, tag = 'smem constant byte address 0x4 - core index']
  #allocation1 [shape = 'u32[72,128]{1,0:T(1,128)}', space=vmem, size = 0x9000, scoped, tag = 'internal scratch']
  #allocation2 [shape = 'f32[1,1]{1,0:T(1,128)S(6)}', space=smem, size = 0x200, scoped, tag = 'scoped memory for modified_tanh.1']
  %s0 = inlined_call_operand.<no memory space> [shape: f32[1,1], index: 0, kind: input, shape index: {}]
  %s1 = inlined_call_operand.vmem [shape: f32[16,128], index: 1, kind: input, shape index: {}]
  %s2 = inlined_call_operand.vmem [shape: f32[16,128], index: 2, kind: output, shape index: {}]
  %s3 = sld [smem:[#allocation0]]
  $region41: #{modified_tanh.1} parent=0
    _
  %s5 = ssub.s32 1, %s3
  %s6 = scalar_select 0, %s5, %s3
  %7 = sst [smem:[#allocation2]] %s0
  loop: start=0, step=1, limit=4
  $region2: #{modified_tanh.1} parent=0 // loop_pre_header
    _
  $region3: #{modified_tanh.1} parent=0 // loop_header
    %s9 = sphi 0, %s13
    %p10 = scmp.ge.s32.totalorder %s9, 4
    %s17 = sphi 0, %s17
    %s19 = sphi 0, %s17
    %s20 = sphi 0, %s19
    %s34 = sphi 0, %s20
    %s40 = sphi 0, %s42
    %s43 = sphi 0, %s40
    %s44 = sphi 0, %s43
    %s60 = sphi 0, %s44
    %s66 = sphi 0, %s68
    %s69 = sphi 0, %s66
    %s70 = sphi 0, %s69
    %s86 = sphi 0, %s70
  $region4: #{modified_tanh.1} parent=0 // loop_header_branch
    %12 = sbr.rel (%p10) target = $region8
  $region5: #{modified_tanh.1} parent=0 // loop_body
    %s14 = ssub.s32 %s9, 1
    %s15 = ssub.s32 %s9, 2
    %s16 = sadd.s32 %s9, 1
    %s18 = sadd.s32 %s17, 1
    %p21 = scmp.eq.s32.totalorder %s9, 1
    %p22 = scmp.ne.s32.totalorder %s17, %s19
    %p23 = scmp.eq.s32.totalorder %s9, 0
    %p24 = por %p22, %p23
    %p25 = scmp.ne.s32.totalorder %s17, %s19
    %p26 = scmp.eq.s32.totalorder %s14, 1
    %p27 = por %p25, %p26
    %p28 = scmp.ne.s32.totalorder %s19, %s20
    %p29 = scmp.eq.s32.totalorder %s14, 0
    %p30 = por %p28, %p29
    %p31 = scmp.ne.s32.totalorder %s19, %s20
    %p32 = scmp.eq.s32.totalorder %s15, 1
    %p33 = por %p31, %p32
    %p35 = scmp.ne.s32.totalorder %s20, %s34
    %p36 = scmp.eq.s32.totalorder %s15, 0
    %p37 = por %p35, %p36
    %s38 = ssub.s32 %s9, %s16
    %p39 = scmp.eq.s32.totalorder %s38, 0
    %s41 = sadd.s32 %s40, 1
    %s42 = scalar_select %p39, %s40, %s41
    %p45 = pneg %p39
    %p46 = scmp.eq.s32.totalorder %s9, 1
    %p47 = por %p45, %p46
    %p48 = scmp.ne.s32.totalorder %s40, %s43
    %p49 = scmp.eq.s32.totalorder %s9, 0
    %p50 = por %p48, %p49
    %p51 = scmp.ne.s32.totalorder %s40, %s43
    %p52 = scmp.eq.s32.totalorder %s14, 1
    %p53 = por %p51, %p52
    %p54 = scmp.ne.s32.totalorder %s43, %s44
    %p55 = scmp.eq.s32.totalorder %s14, 0
    %p56 = por %p54, %p55
    %p57 = scmp.ne.s32.totalorder %s43, %s44
    %p58 = scmp.eq.s32.totalorder %s15, 1
    %p59 = por %p57, %p58
    %p61 = scmp.ne.s32.totalorder %s44, %s60
    %p62 = scmp.eq.s32.totalorder %s15, 0
    %p63 = por %p61, %p62
    %s64 = ssub.s32 %s9, %s16
    %p65 = scmp.eq.s32.totalorder %s64, 0
    %s67 = sadd.s32 %s66, 1
    %s68 = scalar_select %p65, %s66, %s67
    %p71 = pneg %p65
    %p72 = scmp.eq.s32.totalorder %s9, 1
    %p73 = por %p71, %p72
    %p74 = scmp.ne.s32.totalorder %s66, %s69
    %p75 = scmp.eq.s32.totalorder %s9, 0
    %p76 = por %p74, %p75
    %p77 = scmp.ne.s32.totalorder %s66, %s69
    %p78 = scmp.eq.s32.totalorder %s14, 1
    %p79 = por %p77, %p78
    %p80 = scmp.ne.s32.totalorder %s69, %s70
    %p81 = scmp.eq.s32.totalorder %s14, 0
    %p82 = por %p80, %p81
    %p83 = scmp.ne.s32.totalorder %s69, %s70
    %p84 = scmp.eq.s32.totalorder %s15, 1
    %p85 = por %p83, %p84
    %p87 = scmp.ne.s32.totalorder %s70, %s86
    %p88 = scmp.eq.s32.totalorder %s15, 0
    %p89 = por %p87, %p88
    %p90 = scmp.le.s32.totalorder 1, %s9
    %p91 = scmp.lt.s32.totalorder %s9, 3
    %p92 = pnand %p90, %p91
    %p93 = pneg %p92
    // Predicated region
    $region9: #{modified_tanh.1} parent=5 // pred_check
      _
    $region10: #{modified_tanh.1} parent=5 // pred_check_branch
      %95 = sbr.rel (%p92) target = $region12
    $region11: #{modified_tanh.1} parent=5 // pred_region
      %s96 = ssub.s32 %s9, 1
      // Predicated region
      $region13: #{modified_tanh.1} parent=11 // pred_check
        %p97 = pneg %p30
      $region14: #{modified_tanh.1} parent=11 // pred_check_branch
        %99 = sbr.rel (%p97) target = $region16
      $region15: #{modified_tanh.1} parent=11 // pred_region
        _
      $region16: #{modified_tanh.1} parent=11 // pred_fallthru
        _
    $region12: #{modified_tanh.1} parent=5 // pred_fallthru
      _
    %p100 = scmp.lt.s32.totalorder %s9, 2
    // Predicated region
    $region17: #{modified_tanh.1} parent=5 // pred_check
      %p101 = pneg %p100
    $region18: #{modified_tanh.1} parent=5 // pred_check_branch
      %103 = sbr.rel (%p101) target = $region20
    $region19: #{modified_tanh.1} parent=5 // pred_region
      // Predicated region
      $region21: #{modified_tanh.1} parent=19 // pred_check
        %p104 = pneg %p50
      $region22: #{modified_tanh.1} parent=19 // pred_check_branch
        %106 = sbr.rel (%p104) target = $region24
      $region23: #{modified_tanh.1} parent=19 // pred_region
        %p107 = scmp.lt.s32.totalorder %s9, 1
        %s108 = scalar_select %p107, %s9, 1
        %s109 = smul.addr %s108, 8
        %s110 = scalar_lea.vmem %s1, %s109
      $region24: #{modified_tanh.1} parent=19 // pred_fallthru
        _
    $region20: #{modified_tanh.1} parent=5 // pred_fallthru
      _
    %p111 = scmp.le.s32.totalorder 1, %s9
    %p112 = scmp.lt.s32.totalorder %s9, 3
    %p113 = pnand %p111, %p112
    %p114 = pneg %p113
    // Predicated region
    $region25: #{modified_tanh.1} parent=5 // pred_check
      _
    $region26: #{modified_tanh.1} parent=5 // pred_check_branch
      %116 = sbr.rel (%p113) target = $region28
    $region27: #{modified_tanh.1} parent=5 // pred_region
      %s117 = ssub.s32 %s9, 1
      %p118 = pneg %p30
      %p119 = pneg %p27
      %p120 = scmp.lt.s32.totalorder %s14, 1
      %s121 = scalar_select %p120, %s14, 1
      %s122 = smul.addr %s121, 8
      %s123 = scalar_lea.vmem %s1, %s122
      %p124 = pneg %p56
      %p125 = pneg %p53
      %p126 = pneg %p82
      %p127 = pneg %p79
      %p128 = scmp.lt.s32.totalorder %s14, 1
      %s129 = scalar_select %p128, %s14, 1
      %s130 = smul.addr %s129, 8
      %s131 = scalar_lea.vmem %s2, %s130
      %p132 = scmp.lt.s32.totalorder %s14, 1
      %s133 = scalar_select %p132, %s14, 1
      %s134 = smul.addr %s133, 8
      %s135 = scalar_lea.vmem %s1, %s134
      %p136 = scmp.lt.s32.totalorder %s14, 1
      %s137 = scalar_select %p136, %s14, 1
      %s138 = smul.addr %s137, 8
      %s139 = scalar_lea.vmem %s2, %s138
      %s140 = sld [smem:[#allocation2]]
      %s141 = smax.f32 %s140, 0.1
      %s142 = smin.f32 %s141, 1.0
      %s143 = sadd.f32 %s142, 1.0
      %v144 = vstv %s143
      %v145 = vrcp.pop %v144
      %v146 = vmul.f32 %v144, %v145
      %v147 = vsub.f32 1.0, %v146
      %v148 = vmul.f32 %v145, %v147
      %v149 = vadd.f32 %v145, %v148
      %vm150 = vweird.f32 %v144
      %vm151 = vweird.f32 %v145
      %vm152 = vmor %vm150, %vm151
      %v153 = vsel %vm152, %v145, %v149
      %v154 = vand.u32 2147483647, %v144
      %vm155 = vcmp.eq.f32.partialorder %v154, 8.507059e+37
      %v156 = vand.u32 %v144, 2147483648
      %v157 = vor.u32 1.1754944e-38, %v156
      %v158 = vsel %vm155, %v157, %v153
      %s159 = vtos %v158
      %v160 = vld [vmem:[%s135] sm:$0xff]
      %v161 = vtanh.pop %v160
      %v162 = vstv %s142
      %v163 = vmul.f32 %v162, %v160
      %v164 = vadd.f32 %v161, %v163
      %v165 = vstv %s159
      %v166 = vmul.f32 %v164, %v165
      %167 = vst [vmem:[%s139] sm:$0xff] %v166
      %p168 = scmp.lt.s32.totalorder %s14, 1
      %s169 = scalar_select %p168, %s14, 1
      %s170 = smul.addr %s169, 8
      %s171 = scalar_lea.vmem %s2, %s170
      // Predicated region
      $region29: #{modified_tanh.1} parent=27 // pred_check
        %p172 = pneg %p79
      $region30: #{modified_tanh.1} parent=27 // pred_check_branch
        %174 = sbr.rel (%p172) target = $region32
      $region31: #{modified_tanh.1} parent=27 // pred_region
        _
      $region32: #{modified_tanh.1} parent=27 // pred_fallthru
        _
    $region28: #{modified_tanh.1} parent=5 // pred_fallthru
      _
    %p175 = scmp.le.s32.totalorder 2, %s9
    // Predicated region
    $region33: #{modified_tanh.1} parent=5 // pred_check
      %p176 = pneg %p175
    $region34: #{modified_tanh.1} parent=5 // pred_check_branch
      %178 = sbr.rel (%p176) target = $region36
    $region35: #{modified_tanh.1} parent=5 // pred_region
      %s179 = ssub.s32 %s9, 2
      // Predicated region
      $region37: #{modified_tanh.1} parent=35 // pred_check
        %p180 = pneg %p85
      $region38: #{modified_tanh.1} parent=35 // pred_check_branch
        %182 = sbr.rel (%p180) target = $region40
      $region39: #{modified_tanh.1} parent=35 // pred_region
        %p183 = scmp.lt.s32.totalorder %s15, 1
        %s184 = scalar_select %p183, %s15, 1
        %s185 = smul.addr %s184, 8
        %s186 = scalar_lea.vmem %s2, %s185
      $region40: #{modified_tanh.1} parent=35 // pred_fallthru
        _
    $region36: #{modified_tanh.1} parent=5 // pred_fallthru
      _
  $region6: #{modified_tanh.1} parent=0 // loop_footer
    %s13 = sadd.s32 1, %s9
  $region7: #{modified_tanh.1} parent=0 // loop_footer_branch
    %8 = sbr.rel target = $region3
  $region8: #{modified_tanh.1} parent=0 // loop_exit
    _

</llo_original>
